<compile_context>
chip_gen: v6e
topology: v6e:2x2x1
jax: 0.10.0
libtpu: 0.0.40
codegen_flags: <defaults>
</compile_context>

<pallas_src>
import jax
import jax.numpy as jnp
from jax.experimental import pallas as pl
from jax.experimental.pallas import tpu as pltpu


def _masked_scale_kernel(x_ref, m_ref, o_ref):
    # x_ref: (TM, L) feature tile; m_ref: (TM, 1) mask tile in the feature
    # dtype (regular path) or (TM, L) int8 (lane-folded path); o_ref: (TM, L).
    # One load-x, one load-m, one (cast+)mul, one store per vreg — the store
    # slot / HBM stream stays the only limiter.
    m = m_ref[...]
    if m.dtype != x_ref.dtype:          # trace-time branch (fold path only)
        m = m.astype(x_ref.dtype)
    o_ref[...] = x_ref[...] * m


def _choose_row_tile(rows, row_bytes, sublane, block_rows, target_tile_bytes,
                     total_feat_bytes):
    """Pick a sublane-aligned row-tile size that divides `rows` when possible."""
    if block_rows is not None:
        tm = int(block_rows)
    else:
        tm = max(sublane, target_tile_bytes // max(1, row_bytes))

    if tm >= rows:
        # Whole problem fits one tile.  If it is big enough to matter and
        # splits cleanly, keep >=2 "parallel" steps so v7x's 2 TensorCores can
        # both drive DMA; otherwise a single full-extent block.
        if rows % (2 * sublane) == 0 and total_feat_bytes > (1 << 20):
            return rows // 2
        return rows

    tm = max(sublane, (tm // sublane) * sublane)

    # Prefer a tm that divides rows (search down within ~25%) to avoid a
    # padded / masked epilogue tile on the last grid step.
    if rows % tm != 0:
        lo = max(sublane, (3 * tm) // 4)
        cand = tm
        while cand >= lo:
            if rows % cand == 0:
                tm = cand
                break
            cand -= sublane
    return tm


def base_text_encoder_forward(features,
                              attention_mask=None,
                              token_type_ids=None,
                              *,
                              block_rows=None,
                              target_tile_bytes=4 * 1024 * 1024,
                              donate_features=False):
    """Pallas forward for BaseTextEncoder (minimal masked pass-through).

    Args:
        features: [B, S, D] float array of token features.
        attention_mask: optional [B, S] array (float / bool / int); 1 = keep.
        token_type_ids: unused (interface parity with the PyTorch base class).
        block_rows: optional override of the row-tile size (testing only).
        target_tile_bytes: per-block feature-tile budget (default 4 MiB).
        donate_features: alias features->output (only use when the caller
            donates `features`; otherwise XLA inserts a copy).

    Returns:
        [B, S, D] array, same dtype as `features`.
    """
    del token_type_ids  # TODO(synk): unused in the abstract base interface.

    if attention_mask is None:
        # True no-op: no kernel launch, no extra HBM read/write.
        return features

    B, S, D = features.shape
    R = B * S
    itemsize = jnp.dtype(features.dtype).itemsize
    total_feat_bytes = R * D * itemsize

    # Sublane packing multiple for the feature dtype: 8 (f32), 16 (bf16/f16),
    # 32 (int8/fp8).
    sublane = 8 * max(1, 4 // itemsize)

    # ---- Layout selection ---------------------------------------------------
    # Fast path wants a lane-dense (multiple-of-128) output.  If D < 128 but
    # 128//D rows pack evenly into one lane row, fold rows into the lane axis
    # so stores are full unmasked vst (the mask is expanded to int8 — small
    # extra read traffic, far cheaper than 32-wide masked stores).
    fold = (D < 128) and (128 % D == 0) and (R % (128 // D) == 0)
    if fold:
        fold_factor = 128 // D
        rows, lanes = R // fold_factor, 128
        x2 = features.reshape(rows, lanes)
        m2 = jnp.broadcast_to(
            attention_mask.reshape(R, 1).astype(jnp.int8), (R, D)
        ).reshape(rows, lanes)
        mask_lanes = lanes
        sublane = max(sublane, 32)  # int8 mask tile packing
    else:
        # Regular path: narrow (TM, 1) mask in the feature dtype, lane
        # broadcast once per tile on the otherwise-idle XLU.  Lane-dense
        # output whenever D % 128 == 0 (typical encoder widths).
        rows, lanes = R, D
        x2 = features.reshape(rows, lanes)
        m2 = attention_mask.reshape(rows, 1).astype(features.dtype)
        mask_lanes = 1

    # ---- Row-tile size ------------------------------------------------------
    tm = _choose_row_tile(rows, lanes * itemsize, sublane, block_rows,
                          target_tile_bytes, total_feat_bytes)
    grid = (pl.cdiv(rows, tm),)

    # ---- VMEM budget: only raise the scoped limit if an override needs it ---
    x_tile_bytes = tm * lanes * itemsize
    m_tile_bytes = tm * mask_lanes * jnp.dtype(m2.dtype).itemsize
    vmem_est = 4 * x_tile_bytes + 2 * m_tile_bytes + (1 << 20)
    vmem_limit = None
    if vmem_est > (30 << 20):
        vmem_limit = int(min(vmem_est + (4 << 20), 56 << 20))

    extra = {}
    if donate_features:
        extra["input_output_aliases"] = {0: 0}

    out2 = pl.pallas_call(
        _masked_scale_kernel,
        out_shape=jax.ShapeDtypeStruct((rows, lanes), features.dtype),
        grid=grid,
        in_specs=[
            pl.BlockSpec((tm, lanes), lambda i: (i, 0)),
            pl.BlockSpec((tm, mask_lanes), lambda i: (i, 0)),
        ],
        out_specs=pl.BlockSpec((tm, lanes), lambda i: (i, 0)),
        compiler_params=pltpu.CompilerParams(
            dimension_semantics=("parallel",),
            vmem_limit_bytes=vmem_limit),
        **extra,
    )(x2, m2)

    return out2.reshape(B, S, D)


if __name__ == "__main__":
    key = jax.random.PRNGKey(0)
    k1, k2, k3, k4, k5, k6 = jax.random.split(key, 6)

    # --- Small demo shapes consistent with the module interface -------------
    # D=32 < 128 exercises the lane-fold path (lane-dense output).
    B, S, D = 2, 8, 32
    features = jax.random.normal(k1, (B, S, D), dtype=jnp.float32)
    attention_mask = (jax.random.uniform(k2, (B, S)) > 0.3).astype(jnp.float32)

    out = jax.block_until_ready(base_text_encoder_forward(features, attention_mask))
    ref = features * attention_mask[..., None]
    assert out.shape == (B, S, D)
    assert jnp.allclose(out, ref, atol=1e-6), "masked (lane-fold) path mismatch"

    # --- No-mask path: must be an identity (and launches no kernel) ---------
    out_id = jax.block_until_ready(base_text_encoder_forward(features))
    assert jnp.allclose(out_id, features), "identity path mismatch"

    # --- Lane-dense, multi-block tiled bf16 path (D % 128 == 0) -------------
    B2, S2, D2 = 2, 64, 256
    feats2 = jax.random.normal(k3, (B2, S2, D2), dtype=jnp.bfloat16)
    mask2 = jax.random.uniform(k4, (B2, S2)) > 0.5          # bool mask
    out2 = jax.block_until_ready(
        base_text_encoder_forward(feats2, mask2, block_rows=16))
    ref2 = feats2 * mask2[..., None].astype(feats2.dtype)
    assert jnp.allclose(out2.astype(jnp.float32),
                        ref2.astype(jnp.float32)), "tiled bf16 path mismatch"

    # --- Auto-tiled f32 path exercising the 2-step split for multi-TC -------
    B3, S3, D3 = 4, 256, 512
    feats3 = jax.random.normal(k5, (B3, S3, D3), dtype=jnp.float32)
    mask3 = (jax.random.uniform(k6, (B3, S3)) > 0.5).astype(jnp.float32)
    out3 = jax.block_until_ready(base_text_encoder_forward(feats3, mask3))
    ref3 = feats3 * mask3[..., None]
    assert jnp.allclose(out3, ref3, atol=1e-6), "auto-tiled path mismatch"

    print("KERNEL_OK")
</pallas_src>

<mosaic_0001>
module attributes {stable_mosaic.version = 11 : i64} {
  func.func @_masked_scale_kernel(%arg0: i32, %arg1: memref<4x128xf32, #tpu.memory_space<vmem>>, %arg2: memref<4x128xi8, #tpu.memory_space<vmem>>, %arg3: memref<4x128xf32, #tpu.memory_space<vmem>>) attributes {dimension_semantics = [#tpu.dimension_semantics<parallel>], iteration_bounds = array<i64: 1>, scalar_prefetch = 0 : i64, scratch_operands = 0 : i64, tpu.core_type = #tpu.core_type<tc>, window_params = [{transform_indices = @transform_0, window_bounds = array<i64: 4, 128>}, {transform_indices = @transform_1, window_bounds = array<i64: 4, 128>}, {transform_indices = @transform_2, window_bounds = array<i64: 4, 128>}]} {
    %c0 = arith.constant 0 : index
    %c0_0 = arith.constant 0 : index
    %0 = vector.load %arg2[%c0, %c0_0] : memref<4x128xi8, #tpu.memory_space<vmem>>, vector<4x128xi8>
    %1 = arith.sitofp %0 : vector<4x128xi8> to vector<4x128xf32>
    %c0_1 = arith.constant 0 : index
    %c0_2 = arith.constant 0 : index
    %2 = vector.load %arg1[%c0_1, %c0_2] : memref<4x128xf32, #tpu.memory_space<vmem>>, vector<4x128xf32>
    %3 = arith.mulf %2, %1 : vector<4x128xf32>
    %c0_3 = arith.constant 0 : index
    %c0_4 = arith.constant 0 : index
    %4 = vector.load %arg3[%c0_3, %c0_4] : memref<4x128xf32, #tpu.memory_space<vmem>>, vector<4x128xf32>
    tpu.vector_store %arg3[%c0_3, %c0_4], %3 {strides = array<i32>} : memref<4x128xf32, #tpu.memory_space<vmem>>, vector<4x128xf32>,
    return
  }
  func.func @transform_0(%arg0: i32) -> (i32, i32) {
    %c0_i32 = arith.constant 0 : i32
    %c0_i32_0 = arith.constant 0 : i32
    return %arg0, %c0_i32 : i32, i32
  }
  func.func @transform_1(%arg0: i32) -> (i32, i32) {
    %c0_i32 = arith.constant 0 : i32
    %c0_i32_0 = arith.constant 0 : i32
    return %arg0, %c0_i32 : i32, i32
  }
  func.func @transform_2(%arg0: i32) -> (i32, i32) {
    %c0_i32 = arith.constant 0 : i32
    %c0_i32_0 = arith.constant 0 : i32
    return %arg0, %c0_i32 : i32, i32
  }
}

</mosaic_0001>

<llo_original>
// kernel: tpu_custom_call.1
$region0: #{tpu_custom_call.1}
  #allocation0 [shape = 'u32[]', space=smem, size = 0x4, offset = 0x4, fixed_abs, tag = 'smem constant byte address 0x4 - core index']
  #allocation1 [shape = 'u32[144,128]{1,0:T(1,128)}', space=vmem, size = 0x12000, scoped, tag = 'internal scratch']
  %s0 = inlined_call_operand.hbm [shape: f32[4,128], index: 0, kind: input, shape index: {}]
  %s1 = inlined_call_operand.vmem [shape: s8[4,128], index: 1, kind: input, shape index: {}]
  %s2 = inlined_call_operand.hbm [shape: f32[4,128], index: 2, kind: output, shape index: {}]
  %s3 = sld [smem:[#allocation0]]
  $region22: #{tpu_custom_call.1} parent=0
    _
  %s5 = ssub.s32 1, %s3
  %s6 = scalar_select 0, %s5, %s3
  $region1: #{tpu_custom_call.1} parent=0
    #allocation2 [shape = 'u8[2048]{0}', space=vmem, size = 0x800, scoped, tag = 'input window, operand 0, single buffered']
    #allocation3 [shape = 's32[1]{0}', space=sflag, size = 0x4, scoped, tag = 'scoped memory for tpu_custom_call.1']
    #allocation4 [shape = 's32[1]{0}', space=sflag, size = 0x4, scoped, tag = 'scoped memory for tpu_custom_call.1']
    #allocation5 [shape = 'u8[2048]{0}', space=vmem, size = 0x800, scoped, tag = 'output window, operand 0, single buffered']
    %7 = vsyncpa [#allocation3], 0
    %8 = vsyncpa [#allocation4], 0
    // Predicated region
    $region2: #{tpu_custom_call.1} parent=1 // pred_check
      _
    $region3: #{tpu_custom_call.1} parent=1 // pred_check_branch
      %10 = sbr.rel (0) target = $region5
    $region4: #{tpu_custom_call.1} parent=1 // pred_region
      %s12 = ssub.s32 64, 64
      %13 = vsyncadd [#allocation3], %s12
      %s15 = sshll.u32 [#allocation2], 4
      %s16 = int_to_ptr.vmem [resolvable:$true] %s15
      %18 = dma.hbm_to_vmem [thread:$0]  %s0, 64, %s16, [#allocation3]
    $region5: #{tpu_custom_call.1} parent=1 // pred_fallthru
      _
    // Predicated region
    $region6: #{tpu_custom_call.1} parent=1 // pred_check
      _
    $region7: #{tpu_custom_call.1} parent=1 // pred_check_branch
      %20 = sbr.rel (0) target = $region9
    $region8: #{tpu_custom_call.1} parent=1 // pred_region
      _
    $region9: #{tpu_custom_call.1} parent=1 // pred_fallthru
      _
    // Predicated region
    $region10: #{tpu_custom_call.1} parent=1 // pred_check
      _
    $region11: #{tpu_custom_call.1} parent=1 // pred_check_branch
      %22 = sbr.rel (0) target = $region13
    $region12: #{tpu_custom_call.1} parent=1 // pred_region
      %23 = dma.done [#allocation3], 64
    $region13: #{tpu_custom_call.1} parent=1 // pred_fallthru
      _
    %v24 = vld [vmem:[%s1] sm:$0x1]
    %v25 = vunpack.c.0.s8 %v24
    %v26 = vcvt.s32.f32 %v25
    %v27 = vld [vmem:[#allocation2] sm:$0xf]
    %v28 = vmul.f32 %v27, %v26
    %29 = vst [vmem:[#allocation5] sm:$0xf] %v28
    // Predicated region
    $region14: #{tpu_custom_call.1} parent=1 // pred_check
      _
    $region15: #{tpu_custom_call.1} parent=1 // pred_check_branch
      %31 = sbr.rel (0) target = $region17
    $region16: #{tpu_custom_call.1} parent=1 // pred_region
      %s33 = ssub.s32 64, 64
      %34 = vsyncadd [#allocation4], %s33
      %s36 = sshll.u32 [#allocation5], 4
      %s37 = int_to_ptr.vmem [resolvable:$true] %s36
      %39 = dma.vmem_to_hbm [thread:$0]  %s37, 64, %s2, [#allocation4]
    $region17: #{tpu_custom_call.1} parent=1 // pred_fallthru
      _
    // Predicated region
    $region18: #{tpu_custom_call.1} parent=1 // pred_check
      _
    $region19: #{tpu_custom_call.1} parent=1 // pred_check_branch
      %41 = sbr.rel (0) target = $region21
    $region20: #{tpu_custom_call.1} parent=1 // pred_region
      %42 = dma.done [#allocation4], 64
    $region21: #{tpu_custom_call.1} parent=1 // pred_fallthru
      _
    %43 = vsyncpa [#allocation3], 1
    %44 = vsyncpa [#allocation4], 1

</llo_original>
